<compile_context>
chip_gen: v6e
topology: v6e:2x2x1
jax: 0.10.0
libtpu: 0.0.40
codegen_flags: <defaults>
</compile_context>

<pallas_src>
import jax
import jax.numpy as jnp
import numpy as np
from jax.experimental import pallas as pl
from jax.experimental.pallas import tpu as pltpu

MM_DTYPE = jnp.bfloat16   # MXU operand dtype (accumulation stays f32)


# ---------------------------------------------------------------------------
# Fused kernel
# ---------------------------------------------------------------------------
def _fused_cnn_kernel(x_ref, w1_ref, b1_ref, w2_ref, b2_ref,
                      f1w_ref, f1b_ref, f2w_ref, f2b_ref,
                      out_ref, s1_ref, s2_ref):
    f32 = jnp.float32
    nb = x_ref.shape[0]
    mmt = w1_ref.dtype

    x = x_ref[...]                                              # (nb, 28, 28) f32

    # ---- conv1 (1->10, k=5) as ONE banded-im2col MXU matmul ----------------
    # 5 row-shifted views, lane-concatenated: rows = (n, h_out), lanes = (i, col).
    pat1 = jnp.concatenate([x[:, i:i + 24, :] for i in range(5)], axis=-1)
    pat1 = pat1.reshape(nb * 24, 5 * 28).astype(mmt)            # (nb*24, 140)
    y1 = jnp.dot(pat1, w1_ref[...], preferred_element_type=f32)  # (nb*24, 240)
    # lanes of y1: (w%2)*120 + co*12 + w//2   (pool-friendly, baked into w1/b1)
    y1 = jnp.maximum(y1.reshape(nb, 24, 240) + b1_ref[...], 0.0)

    # ---- pool1 (2x2, stride 2) ---------------------------------------------
    # W direction: even-w half vs odd-w half of the lane axis (contiguous max).
    s1_ref[...] = jnp.maximum(y1[:, :, 0:120], y1[:, :, 120:240])   # (nb, 24, 120)
    # H direction: strided-sublane reads from scratch.
    p1 = jnp.maximum(s1_ref[:, pl.ds(0, 12, stride=2), :],
                     s1_ref[:, pl.ds(1, 12, stride=2), :])          # (nb, 12, 120)
    # lanes of p1: ci*12 + w12

    # ---- conv2 (10->10, k=5) as ONE banded-im2col MXU matmul ---------------
    pat2 = jnp.concatenate([p1[:, i:i + 8, :] for i in range(5)], axis=-1)
    pat2 = pat2.reshape(nb * 8, 5 * 120).astype(mmt)            # (nb*8, 600)
    y2 = jnp.dot(pat2, w2_ref[...], preferred_element_type=f32)  # (nb*8, 80)
    # lanes of y2: (w%2)*40 + co*4 + w//2
    y2 = jnp.maximum(y2.reshape(nb, 8, 80) + b2_ref[...], 0.0)

    # ---- pool2 (2x2, stride 2) ---------------------------------------------
    s2_ref[...] = jnp.maximum(y2[:, :, 0:40], y2[:, :, 40:80])      # (nb, 8, 40)
    p2 = jnp.maximum(s2_ref[:, pl.ds(0, 4, stride=2), :],
                     s2_ref[:, pl.ds(1, 4, stride=2), :])           # (nb, 4, 40)
    # lanes of p2: ci*4 + w4 ; sublane = h4

    # ---- fc1 + ReLU (flatten order h*40 + ci*4 + w baked into f1w) ---------
    h1 = jnp.dot(p2.reshape(nb, 160).astype(mmt), f1w_ref[...],
                 preferred_element_type=f32)
    h1 = jnp.maximum(h1 + f1b_ref[...], 0.0)                        # (nb, 100)

    # ---- fc2 (output zero-padded to 128 lanes via the prepared weight) -----
    out = jnp.dot(h1.astype(mmt), f2w_ref[...],
                  preferred_element_type=f32) + f2b_ref[...]        # (nb, 128)
    out_ref[...] = out.astype(out_ref.dtype)


# ---------------------------------------------------------------------------
# Wrapper
# ---------------------------------------------------------------------------
def cnn_net_forward(kp, x_nchw, *, max_batch_tile=64):
    """Forward of CnnNet. kp: prepared (kernel-layout) params; x: (N,1,28,28)."""
    n = x_nchw.shape[0]
    x3 = x_nchw.reshape(n, 28, 28).astype(jnp.float32)   # drop the singleton channel

    # Batch tile: multiple of 8, capped, and >= 2 grid steps when n > 8
    # (so "parallel" can use both v7x TensorCores).  Pad n up to a multiple.
    if n <= 8:
        nb = n
    else:
        nb = min(max_batch_tile, 8 * pl.cdiv(pl.cdiv(n, 2), 8))
    n_pad = nb * pl.cdiv(n, nb)
    if n_pad != n:
        x3 = jnp.pad(x3, ((0, n_pad - n), (0, 0), (0, 0)))
    grid = (n_pad // nb,)

    out = pl.pallas_call(
        _fused_cnn_kernel,
        out_shape=jax.ShapeDtypeStruct((n_pad, 128), jnp.float32),
        grid=grid,
        in_specs=[
            pl.BlockSpec((nb, 28, 28), lambda b: (b, 0, 0)),   # x
            pl.BlockSpec((140, 240), lambda b: (0, 0)),        # conv1 banded w
            pl.BlockSpec((1, 240), lambda b: (0, 0)),          # conv1 b (tiled)
            pl.BlockSpec((600, 80), lambda b: (0, 0)),         # conv2 banded w
            pl.BlockSpec((1, 80), lambda b: (0, 0)),           # conv2 b (tiled)
            pl.BlockSpec((160, 100), lambda b: (0, 0)),        # fc1 w
            pl.BlockSpec((1, 100), lambda b: (0, 0)),          # fc1 b
            pl.BlockSpec((100, 128), lambda b: (0, 0)),        # fc2 w (lane-padded)
            pl.BlockSpec((1, 128), lambda b: (0, 0)),          # fc2 b (lane-padded)
        ],
        out_specs=pl.BlockSpec((nb, 128), lambda b: (b, 0)),
        scratch_shapes=[
            pltpu.VMEM((nb, 24, 120), jnp.float32),   # pool1 half-pooled
            pltpu.VMEM((nb, 8, 40), jnp.float32),     # pool2 half-pooled
        ],
        compiler_params=pltpu.CompilerParams(
            dimension_semantics=("parallel",),
            vmem_limit_bytes=32 * 1024 * 1024,
        ),
    )(x3, kp["w1"], kp["b1"], kp["w2"], kp["b2"],
      kp["f1w"], kp["f1b"], kp["f2w"], kp["f2b"])

    return out[:n, :10]


# ---------------------------------------------------------------------------
# Parameters (PyTorch layout) + one-time kernel-layout reshuffle
# ---------------------------------------------------------------------------
def init_params(key):
    """Deterministic synthetic parameters with the same shapes as CnnNet."""
    ks = jax.random.split(key, 8)
    s = 0.1
    return {
        "conv1_w": s * jax.random.normal(ks[0], (10, 1, 5, 5), jnp.float32),
        "conv1_b": s * jax.random.normal(ks[1], (10,), jnp.float32),
        "conv2_w": s * jax.random.normal(ks[2], (10, 10, 5, 5), jnp.float32),
        "conv2_b": s * jax.random.normal(ks[3], (10,), jnp.float32),
        "fc1_w": s * jax.random.normal(ks[4], (100, 160), jnp.float32),
        "fc1_b": s * jax.random.normal(ks[5], (100,), jnp.float32),
        "fc2_w": s * jax.random.normal(ks[6], (10, 100), jnp.float32),
        "fc2_b": s * jax.random.normal(ks[7], (10,), jnp.float32),
    }


def prepare_params(p, mm_dtype=MM_DTYPE):
    """One-time host-side reshuffle into banded / lane-dense kernel layouts."""
    c1w = np.asarray(p["conv1_w"], np.float32)
    c1b = np.asarray(p["conv1_b"], np.float32)
    c2w = np.asarray(p["conv2_w"], np.float32)
    c2b = np.asarray(p["conv2_b"], np.float32)
    f1w = np.asarray(p["fc1_w"], np.float32)
    f1b = np.asarray(p["fc1_b"], np.float32)
    f2w = np.asarray(p["fc2_w"], np.float32)
    f2b = np.asarray(p["fc2_b"], np.float32)

    def out_lane(w, co, W, C):
        # Pool-friendly conv-output lane layout: parity(w), channel, w//2.
        return (w % 2) * (W // 2 * C) + co * (W // 2) + (w // 2)

    # conv1: rows = (i, input column) over 5*28; cols = out_lane(w, co, 24, 10).
    W1 = np.zeros((5 * 28, 240), np.float32)
    B1 = np.zeros((1, 240), np.float32)
    for w in range(24):
        for co in range(10):
            q = out_lane(w, co, 24, 10)
            B1[0, q] = c1b[co]
            for i in range(5):
                for j in range(5):
                    W1[i * 28 + (w + j), q] = c1w[co, 0, i, j]

    # conv2: input lanes ci*12 + w_in; rows = (i, ci, w_in) over 5*120.
    W2 = np.zeros((5 * 120, 80), np.float32)
    B2 = np.zeros((1, 80), np.float32)
    for w in range(8):
        for co in range(10):
            q = out_lane(w, co, 8, 10)
            B2[0, q] = c2b[co]
            for i in range(5):
                for j in range(5):
                    for ci in range(10):
                        W2[i * 120 + ci * 12 + (w + j), q] = c2w[co, ci, i, j]

    # fc1: kernel feature order h*40 + ci*4 + w  ->  torch order ci*16 + h*4 + w.
    F1 = np.zeros((160, 100), np.float32)
    for h in range(4):
        for ci in range(10):
            for w in range(4):
                F1[h * 40 + ci * 4 + w, :] = f1w[:, ci * 16 + h * 4 + w]

    # fc2: transpose + zero-pad output lanes 10 -> 128 for unmasked stores.
    F2 = np.zeros((100, 128), np.float32)
    F2[:, :10] = f2w.T
    B4 = np.zeros((1, 128), np.float32)
    B4[0, :10] = f2b

    return {
        "w1": jnp.asarray(W1, mm_dtype), "b1": jnp.asarray(B1),
        "w2": jnp.asarray(W2, mm_dtype), "b2": jnp.asarray(B2),
        "f1w": jnp.asarray(F1, mm_dtype), "f1b": jnp.asarray(f1b.reshape(1, 100)),
        "f2w": jnp.asarray(F2, mm_dtype), "f2b": jnp.asarray(B4),
    }


def reference_forward(p, x_nchw):
    """Pure-XLA reference matching the PyTorch module exactly (f32)."""
    dn = ("NCHW", "OIHW", "NCHW")
    y = jax.lax.conv_general_dilated(x_nchw, p["conv1_w"], (1, 1), "VALID",
                                     dimension_numbers=dn)
    y = jax.nn.relu(y + p["conv1_b"].reshape(1, 10, 1, 1))
    y = jax.lax.reduce_window(y, -jnp.inf, jax.lax.max,
                              (1, 1, 2, 2), (1, 1, 2, 2), "VALID")
    y = jax.lax.conv_general_dilated(y, p["conv2_w"], (1, 1), "VALID",
                                     dimension_numbers=dn)
    y = jax.nn.relu(y + p["conv2_b"].reshape(1, 10, 1, 1))
    y = jax.lax.reduce_window(y, -jnp.inf, jax.lax.max,
                              (1, 1, 2, 2), (1, 1, 2, 2), "VALID")
    flat = y.reshape(y.shape[0], 4 * 4 * 10)
    h = jax.nn.relu(flat @ p["fc1_w"].T + p["fc1_b"])
    return h @ p["fc2_w"].T + p["fc2_b"]


if __name__ == "__main__":
    key = jax.random.PRNGKey(0)
    k_params, k_x = jax.random.split(key)
    params = init_params(k_params)
    kparams = prepare_params(params)          # one-time layout reshuffle (bf16 MXU weights)

    fwd = jax.jit(cnn_net_forward)
    # bf16 MXU operands (f32 accumulation) need a looser tolerance than pure f32.
    tol = 5e-2 if MM_DTYPE == jnp.bfloat16 else 1e-3

    # n=2: single small block.  n=20: padded, multi-step grid (nb=16, 2 steps).
    for n in (2, 20):
        x = jax.random.normal(jax.random.fold_in(k_x, n), (n, 1, 28, 28), jnp.float32)
        out = jax.block_until_ready(fwd(kparams, x))
        assert out.shape == (n, 10) and out.dtype == jnp.float32
        ref = reference_forward(params, x)
        err = float(jnp.max(jnp.abs(out - ref)))
        assert err < tol, f"n={n}: mismatch vs reference, max abs err {err}"
    print("KERNEL_OK")
</pallas_src>

<mosaic_0001>
module attributes {stable_mosaic.version = 11 : i64} {
  func.func @_fused_cnn_kernel(%arg0: i32, %arg1: memref<2x28x28xf32, #tpu.memory_space<vmem>>, %arg2: memref<140x240xbf16, #tpu.memory_space<vmem>>, %arg3: memref<1x240xf32, #tpu.memory_space<vmem>>, %arg4: memref<600x80xbf16, #tpu.memory_space<vmem>>, %arg5: memref<1x80xf32, #tpu.memory_space<vmem>>, %arg6: memref<160x100xbf16, #tpu.memory_space<vmem>>, %arg7: memref<1x100xf32, #tpu.memory_space<vmem>>, %arg8: memref<100x128xbf16, #tpu.memory_space<vmem>>, %arg9: memref<1x128xf32, #tpu.memory_space<vmem>>, %arg10: memref<2x128xf32, #tpu.memory_space<vmem>>, %arg11: memref<2x24x120xf32, #tpu.memory_space<vmem>>, %arg12: memref<2x8x40xf32, #tpu.memory_space<vmem>>) attributes {dimension_semantics = [#tpu.dimension_semantics<parallel>], iteration_bounds = array<i64: 1>, scalar_prefetch = 0 : i64, scratch_operands = 2 : i64, tpu.core_type = #tpu.core_type<tc>, window_params = [{transform_indices = @transform_0, window_bounds = array<i64: 2, 28, 28>}, {pipeline_mode = #tpu.pipeline_mode<synchronous>, transform_indices = @transform_1, window_bounds = array<i64: 140, 240>}, {pipeline_mode = #tpu.pipeline_mode<synchronous>, transform_indices = @transform_2, window_bounds = array<i64: 1, 240>}, {pipeline_mode = #tpu.pipeline_mode<synchronous>, transform_indices = @transform_3, window_bounds = array<i64: 600, 80>}, {pipeline_mode = #tpu.pipeline_mode<synchronous>, transform_indices = @transform_4, window_bounds = array<i64: 1, 80>}, {pipeline_mode = #tpu.pipeline_mode<synchronous>, transform_indices = @transform_5, window_bounds = array<i64: 160, 100>}, {pipeline_mode = #tpu.pipeline_mode<synchronous>, transform_indices = @transform_6, window_bounds = array<i64: 1, 100>}, {pipeline_mode = #tpu.pipeline_mode<synchronous>, transform_indices = @transform_7, window_bounds = array<i64: 100, 128>}, {pipeline_mode = #tpu.pipeline_mode<synchronous>, transform_indices = @transform_8, window_bounds = array<i64: 1, 128>}, {transform_indices = @transform_9, window_bounds = array<i64: 2, 128>}]} {
    %c0 = arith.constant 0 : index
    %c0_0 = arith.constant 0 : index
    %c0_1 = arith.constant 0 : index
    %0 = vector.load %arg1[%c0, %c0_0, %c0_1] : memref<2x28x28xf32, #tpu.memory_space<vmem>>, vector<2x28x28xf32>
    %1 = vector.extract_strided_slice %0 {offsets = [0, 0, 0], sizes = [2, 24, 28], strides = [1, 1, 1]} : vector<2x28x28xf32> to vector<2x24x28xf32>
    %2 = vector.extract_strided_slice %0 {offsets = [0, 1, 0], sizes = [2, 24, 28], strides = [1, 1, 1]} : vector<2x28x28xf32> to vector<2x24x28xf32>
    %3 = vector.extract_strided_slice %0 {offsets = [0, 2, 0], sizes = [2, 24, 28], strides = [1, 1, 1]} : vector<2x28x28xf32> to vector<2x24x28xf32>
    %4 = vector.extract_strided_slice %0 {offsets = [0, 3, 0], sizes = [2, 24, 28], strides = [1, 1, 1]} : vector<2x28x28xf32> to vector<2x24x28xf32>
    %5 = vector.extract_strided_slice %0 {offsets = [0, 4, 0], sizes = [2, 24, 28], strides = [1, 1, 1]} : vector<2x28x28xf32> to vector<2x24x28xf32>
    %6 = tpu.concatenate %1, %2, %3, %4, %5 in 2 : vector<2x24x28xf32>, vector<2x24x28xf32>, vector<2x24x28xf32>, vector<2x24x28xf32>, vector<2x24x28xf32> -> vector<2x24x140xf32>
    %7 = vector.shape_cast %6 : vector<2x24x140xf32> to vector<48x140xf32>
    %8 = arith.truncf %7 : vector<48x140xf32> to vector<48x140xbf16>
    %c0_2 = arith.constant 0 : index
    %c0_3 = arith.constant 0 : index
    %9 = vector.load %arg2[%c0_2, %c0_3] : memref<140x240xbf16, #tpu.memory_space<vmem>>, vector<140x240xbf16>
    %cst = arith.constant dense<0.000000e+00> : vector<48x240xf32>
    %10 = tpu.matmul %8, %9, %cst {dimension_numbers = #tpu.dot_dimension_numbers<[1], [0], [0], [1], [0, 0, 1, 1], [], []>} : vector<48x140xbf16>, vector<140x240xbf16>, vector<48x240xf32> -> vector<48x240xf32>
    %11 = vector.shape_cast %10 : vector<48x240xf32> to vector<2x24x240xf32>
    %c0_4 = arith.constant 0 : index
    %c0_5 = arith.constant 0 : index
    %12 = vector.load %arg3[%c0_4, %c0_5] : memref<1x240xf32, #tpu.memory_space<vmem>>, vector<1x240xf32>
    %13 = vector.shape_cast %12 : vector<1x240xf32> to vector<1x1x240xf32>
    %14 = vector.broadcast %13 : vector<1x1x240xf32> to vector<2x24x240xf32>
    %15 = arith.addf %11, %14 : vector<2x24x240xf32>
    %cst_6 = arith.constant 0.000000e+00 : f32
    %16 = vector.broadcast %cst_6 : f32 to vector<2x24x240xf32>
    %17 = arith.maximumf %15, %16 : vector<2x24x240xf32>
    %18 = vector.extract_strided_slice %17 {offsets = [0, 0, 0], sizes = [2, 24, 120], strides = [1, 1, 1]} : vector<2x24x240xf32> to vector<2x24x120xf32>
    %19 = vector.extract_strided_slice %17 {offsets = [0, 0, 120], sizes = [2, 24, 120], strides = [1, 1, 1]} : vector<2x24x240xf32> to vector<2x24x120xf32>
    %20 = arith.maximumf %18, %19 : vector<2x24x120xf32>
    %c0_7 = arith.constant 0 : index
    %c0_8 = arith.constant 0 : index
    %c0_9 = arith.constant 0 : index
    %21 = vector.load %arg11[%c0_7, %c0_8, %c0_9] : memref<2x24x120xf32, #tpu.memory_space<vmem>>, vector<2x24x120xf32>
    tpu.vector_store %arg11[%c0_7, %c0_8, %c0_9], %20 {strides = array<i32>} : memref<2x24x120xf32, #tpu.memory_space<vmem>>, vector<2x24x120xf32>,
    %c0_10 = arith.constant 0 : index
    %c0_11 = arith.constant 0 : index
    %c0_12 = arith.constant 0 : index
    %22 = tpu.strided_load %arg11[%c0_10, %c0_11, %c0_12] {strides = array<i32: 1, 2, 1>} : memref<2x24x120xf32, #tpu.memory_space<vmem>>, vector<2x12x120xf32>
    %c0_13 = arith.constant 0 : index
    %c1 = arith.constant 1 : index
    %c0_14 = arith.constant 0 : index
    %23 = tpu.strided_load %arg11[%c0_13, %c1, %c0_14] {strides = array<i32: 1, 2, 1>} : memref<2x24x120xf32, #tpu.memory_space<vmem>>, vector<2x12x120xf32>
    %24 = arith.maximumf %22, %23 : vector<2x12x120xf32>
    %25 = vector.extract_strided_slice %24 {offsets = [0, 0, 0], sizes = [2, 8, 120], strides = [1, 1, 1]} : vector<2x12x120xf32> to vector<2x8x120xf32>
    %26 = vector.extract_strided_slice %24 {offsets = [0, 1, 0], sizes = [2, 8, 120], strides = [1, 1, 1]} : vector<2x12x120xf32> to vector<2x8x120xf32>
    %27 = vector.extract_strided_slice %24 {offsets = [0, 2, 0], sizes = [2, 8, 120], strides = [1, 1, 1]} : vector<2x12x120xf32> to vector<2x8x120xf32>
    %28 = vector.extract_strided_slice %24 {offsets = [0, 3, 0], sizes = [2, 8, 120], strides = [1, 1, 1]} : vector<2x12x120xf32> to vector<2x8x120xf32>
    %29 = vector.extract_strided_slice %24 {offsets = [0, 4, 0], sizes = [2, 8, 120], strides = [1, 1, 1]} : vector<2x12x120xf32> to vector<2x8x120xf32>
    %30 = tpu.concatenate %25, %26, %27, %28, %29 in 2 : vector<2x8x120xf32>, vector<2x8x120xf32>, vector<2x8x120xf32>, vector<2x8x120xf32>, vector<2x8x120xf32> -> vector<2x8x600xf32>
    %31 = vector.shape_cast %30 : vector<2x8x600xf32> to vector<16x600xf32>
    %32 = arith.truncf %31 : vector<16x600xf32> to vector<16x600xbf16>
    %c0_15 = arith.constant 0 : index
    %c0_16 = arith.constant 0 : index
    %33 = vector.load %arg4[%c0_15, %c0_16] : memref<600x80xbf16, #tpu.memory_space<vmem>>, vector<600x80xbf16>
    %cst_17 = arith.constant dense<0.000000e+00> : vector<16x80xf32>
    %34 = tpu.matmul %32, %33, %cst_17 {dimension_numbers = #tpu.dot_dimension_numbers<[1], [0], [0], [1], [0, 0, 1, 1], [], []>} : vector<16x600xbf16>, vector<600x80xbf16>, vector<16x80xf32> -> vector<16x80xf32>
    %35 = vector.shape_cast %34 : vector<16x80xf32> to vector<2x8x80xf32>
    %c0_18 = arith.constant 0 : index
    %c0_19 = arith.constant 0 : index
    %36 = vector.load %arg5[%c0_18, %c0_19] : memref<1x80xf32, #tpu.memory_space<vmem>>, vector<1x80xf32>
    %37 = vector.shape_cast %36 : vector<1x80xf32> to vector<1x1x80xf32>
    %38 = vector.broadcast %37 : vector<1x1x80xf32> to vector<2x8x80xf32>
    %39 = arith.addf %35, %38 : vector<2x8x80xf32>
    %cst_20 = arith.constant 0.000000e+00 : f32
    %40 = vector.broadcast %cst_20 : f32 to vector<2x8x80xf32>
    %41 = arith.maximumf %39, %40 : vector<2x8x80xf32>
    %42 = vector.extract_strided_slice %41 {offsets = [0, 0, 0], sizes = [2, 8, 40], strides = [1, 1, 1]} : vector<2x8x80xf32> to vector<2x8x40xf32>
    %43 = vector.extract_strided_slice %41 {offsets = [0, 0, 40], sizes = [2, 8, 40], strides = [1, 1, 1]} : vector<2x8x80xf32> to vector<2x8x40xf32>
    %44 = arith.maximumf %42, %43 : vector<2x8x40xf32>
    %c0_21 = arith.constant 0 : index
    %c0_22 = arith.constant 0 : index
    %c0_23 = arith.constant 0 : index
    %45 = vector.load %arg12[%c0_21, %c0_22, %c0_23] : memref<2x8x40xf32, #tpu.memory_space<vmem>>, vector<2x8x40xf32>
    tpu.vector_store %arg12[%c0_21, %c0_22, %c0_23], %44 {strides = array<i32>} : memref<2x8x40xf32, #tpu.memory_space<vmem>>, vector<2x8x40xf32>,
    %c0_24 = arith.constant 0 : index
    %c0_25 = arith.constant 0 : index
    %c0_26 = arith.constant 0 : index
    %46 = tpu.strided_load %arg12[%c0_24, %c0_25, %c0_26] {strides = array<i32: 1, 2, 1>} : memref<2x8x40xf32, #tpu.memory_space<vmem>>, vector<2x4x40xf32>
    %c0_27 = arith.constant 0 : index
    %c1_28 = arith.constant 1 : index
    %c0_29 = arith.constant 0 : index
    %47 = tpu.strided_load %arg12[%c0_27, %c1_28, %c0_29] {strides = array<i32: 1, 2, 1>} : memref<2x8x40xf32, #tpu.memory_space<vmem>>, vector<2x4x40xf32>
    %48 = arith.maximumf %46, %47 : vector<2x4x40xf32>
    %49 = vector.shape_cast %48 : vector<2x4x40xf32> to vector<2x160xf32>
    %50 = arith.truncf %49 : vector<2x160xf32> to vector<2x160xbf16>
    %c0_30 = arith.constant 0 : index
    %c0_31 = arith.constant 0 : index
    %51 = vector.load %arg6[%c0_30, %c0_31] : memref<160x100xbf16, #tpu.memory_space<vmem>>, vector<160x100xbf16>
    %cst_32 = arith.constant dense<0.000000e+00> : vector<2x100xf32>
    %52 = tpu.matmul %50, %51, %cst_32 {dimension_numbers = #tpu.dot_dimension_numbers<[1], [0], [0], [1], [0, 0, 1, 1], [], []>} : vector<2x160xbf16>, vector<160x100xbf16>, vector<2x100xf32> -> vector<2x100xf32>
    %c0_33 = arith.constant 0 : index
    %c0_34 = arith.constant 0 : index
    %53 = vector.load %arg7[%c0_33, %c0_34] : memref<1x100xf32, #tpu.memory_space<vmem>>, vector<1x100xf32>
    %54 = vector.broadcast %53 : vector<1x100xf32> to vector<2x100xf32>
    %55 = arith.addf %52, %54 : vector<2x100xf32>
    %cst_35 = arith.constant 0.000000e+00 : f32
    %56 = vector.broadcast %cst_35 : f32 to vector<2x100xf32>
    %57 = arith.maximumf %55, %56 : vector<2x100xf32>
    %58 = arith.truncf %57 : vector<2x100xf32> to vector<2x100xbf16>
    %c0_36 = arith.constant 0 : index
    %c0_37 = arith.constant 0 : index
    %59 = vector.load %arg8[%c0_36, %c0_37] : memref<100x128xbf16, #tpu.memory_space<vmem>>, vector<100x128xbf16>
    %cst_38 = arith.constant dense<0.000000e+00> : vector<2x128xf32>
    %60 = tpu.matmul %58, %59, %cst_38 {dimension_numbers = #tpu.dot_dimension_numbers<[1], [0], [0], [1], [0, 0, 1, 1], [], []>} : vector<2x100xbf16>, vector<100x128xbf16>, vector<2x128xf32> -> vector<2x128xf32>
    %c0_39 = arith.constant 0 : index
    %c0_40 = arith.constant 0 : index
    %61 = vector.load %arg9[%c0_39, %c0_40] : memref<1x128xf32, #tpu.memory_space<vmem>>, vector<1x128xf32>
    %62 = vector.broadcast %61 : vector<1x128xf32> to vector<2x128xf32>
    %63 = arith.addf %60, %62 : vector<2x128xf32>
    %c0_41 = arith.constant 0 : index
    %c0_42 = arith.constant 0 : index
    %64 = vector.load %arg10[%c0_41, %c0_42] : memref<2x128xf32, #tpu.memory_space<vmem>>, vector<2x128xf32>
    tpu.vector_store %arg10[%c0_41, %c0_42], %63 {strides = array<i32>} : memref<2x128xf32, #tpu.memory_space<vmem>>, vector<2x128xf32>,
    return
  }
  func.func @transform_0(%arg0: i32) -> (i32, i32, i32) {
    %c0_i32 = arith.constant 0 : i32
    %c0_i32_0 = arith.constant 0 : i32
    %c0_i32_1 = arith.constant 0 : i32
    return %arg0, %c0_i32, %c0_i32_0 : i32, i32, i32
  }
  func.func @transform_1(%arg0: i32) -> (i32, i32) {
    %c0_i32 = arith.constant 0 : i32
    %c0_i32_0 = arith.constant 0 : i32
    %c0_i32_1 = arith.constant 0 : i32
    return %c0_i32, %c0_i32_0 : i32, i32
  }
  func.func @transform_2(%arg0: i32) -> (i32, i32) {
    %c0_i32 = arith.constant 0 : i32
    %c0_i32_0 = arith.constant 0 : i32
    %c0_i32_1 = arith.constant 0 : i32
    return %c0_i32, %c0_i32_0 : i32, i32
  }
  func.func @transform_3(%arg0: i32) -> (i32, i32) {
    %c0_i32 = arith.constant 0 : i32
    %c0_i32_0 = arith.constant 0 : i32
    %c0_i32_1 = arith.constant 0 : i32
    return %c0_i32, %c0_i32_0 : i32, i32
  }
  func.func @transform_4(%arg0: i32) -> (i32, i32) {
    %c0_i32 = arith.constant 0 : i32
    %c0_i32_0 = arith.constant 0 : i32
    %c0_i32_1 = arith.constant 0 : i32
    return %c0_i32, %c0_i32_0 : i32, i32
  }
  func.func @transform_5(%arg0: i32) -> (i32, i32) {
    %c0_i32 = arith.constant 0 : i32
    %c0_i32_0 = arith.constant 0 : i32
    %c0_i32_1 = arith.constant 0 : i32
    return %c0_i32, %c0_i32_0 : i32, i32
  }
  func.func @transform_6(%arg0: i32) -> (i32, i32) {
    %c0_i32 = arith.constant 0 : i32
    %c0_i32_0 = arith.constant 0 : i32
    %c0_i32_1 = arith.constant 0 : i32
    return %c0_i32, %c0_i32_0 : i32, i32
  }
  func.func @transform_7(%arg0: i32) -> (i32, i32) {
    %c0_i32 = arith.constant 0 : i32
    %c0_i32_0 = arith.constant 0 : i32
    %c0_i32_1 = arith.constant 0 : i32
    return %c0_i32, %c0_i32_0 : i32, i32
  }
  func.func @transform_8(%arg0: i32) -> (i32, i32) {
    %c0_i32 = arith.constant 0 : i32
    %c0_i32_0 = arith.constant 0 : i32
    %c0_i32_1 = arith.constant 0 : i32
    return %c0_i32, %c0_i32_0 : i32, i32
  }
  func.func @transform_9(%arg0: i32) -> (i32, i32) {
    %c0_i32 = arith.constant 0 : i32
    %c0_i32_0 = arith.constant 0 : i32
    return %arg0, %c0_i32 : i32, i32
  }
}

</mosaic_0001>

<llo_original>
// kernel: cnn_net_forward.1
$region0: #{cnn_net_forward.1}
  #allocation0 [shape = 'u32[]', space=smem, size = 0x4, offset = 0x4, fixed_abs, tag = 'smem constant byte address 0x4 - core index']
  #allocation1 [shape = 'u32[144,128]{1,0:T(1,128)}', space=vmem, size = 0x12000, scoped, tag = 'internal scratch']
  #allocation2 [shape = 'f32[2,24,120]{2,1,0:T(8,128)}', space=vmem, size = 0x6000, scoped, tag = 'scratch operand']
  #allocation3 [shape = 'f32[2,8,40]{2,1,0:T(8,128)}', space=vmem, size = 0x2000, scoped, tag = 'scratch operand']
  %s0 = inlined_call_operand.vmem [shape: f32[2,28,28], index: 0, kind: input, shape index: {}]
  %s1 = inlined_call_operand.vmem [shape: bf16[140,240], index: 1, kind: input, shape index: {}]
  %s2 = inlined_call_operand.vmem [shape: f32[1,240], index: 2, kind: input, shape index: {}]
  %s3 = inlined_call_operand.vmem [shape: bf16[600,80], index: 3, kind: input, shape index: {}]
  %s4 = inlined_call_operand.vmem [shape: f32[1,80], index: 4, kind: input, shape index: {}]
  %s5 = inlined_call_operand.vmem [shape: bf16[160,100], index: 5, kind: input, shape index: {}]
  %s6 = inlined_call_operand.vmem [shape: f32[1,100], index: 6, kind: input, shape index: {}]
  %s7 = inlined_call_operand.vmem [shape: bf16[100,128], index: 7, kind: input, shape index: {}]
  %s8 = inlined_call_operand.vmem [shape: f32[1,128], index: 8, kind: input, shape index: {}]
  %s9 = inlined_call_operand.hbm [shape: f32[2,128], index: 9, kind: output, shape index: {}]
  %s10 = sld [smem:[#allocation0]]
  $region46: #{cnn_net_forward.1} parent=0
    _
  %s12 = ssub.s32 1, %s10
  %s13 = scalar_select 0, %s12, %s10
  $region1: #{cnn_net_forward.1} parent=0
    #allocation4 [shape = 'u8[1024]{0}', space=vmem, size = 0x400, scoped, tag = 'output window, operand 0, single buffered']
    #allocation5 [shape = 's32[1]{0}', space=sflag, size = 0x4, scoped, tag = 'scoped memory for cnn_net_forward.1']
    %14 = vsyncpa [#allocation5], 0
    // Predicated region
    $region2: #{cnn_net_forward.1} parent=1 // pred_check
      _
    $region3: #{cnn_net_forward.1} parent=1 // pred_check_branch
      %16 = sbr.rel (0) target = $region5
    $region4: #{cnn_net_forward.1} parent=1 // pred_region
      _
    $region5: #{cnn_net_forward.1} parent=1 // pred_fallthru
      _
    // Predicated region
    $region6: #{cnn_net_forward.1} parent=1 // pred_check
      _
    $region7: #{cnn_net_forward.1} parent=1 // pred_check_branch
      %18 = sbr.rel (0) target = $region9
    $region8: #{cnn_net_forward.1} parent=1 // pred_region
      _
    $region9: #{cnn_net_forward.1} parent=1 // pred_fallthru
      _
    // Predicated region
    $region10: #{cnn_net_forward.1} parent=1 // pred_check
      _
    $region11: #{cnn_net_forward.1} parent=1 // pred_check_branch
      %20 = sbr.rel (0) target = $region13
    $region12: #{cnn_net_forward.1} parent=1 // pred_region
      _
    $region13: #{cnn_net_forward.1} parent=1 // pred_fallthru
      _
    // Predicated region
    $region14: #{cnn_net_forward.1} parent=1 // pred_check
      _
    $region15: #{cnn_net_forward.1} parent=1 // pred_check_branch
      %22 = sbr.rel (0) target = $region17
    $region16: #{cnn_net_forward.1} parent=1 // pred_region
      _
    $region17: #{cnn_net_forward.1} parent=1 // pred_fallthru
      _
    // Predicated region
    $region18: #{cnn_net_forward.1} parent=1 // pred_check
      _
    $region19: #{cnn_net_forward.1} parent=1 // pred_check_branch
      %24 = sbr.rel (0) target = $region21
    $region20: #{cnn_net_forward.1} parent=1 // pred_region
      _
    $region21: #{cnn_net_forward.1} parent=1 // pred_fallthru
      _
    // Predicated region
    $region22: #{cnn_net_forward.1} parent=1 // pred_check
      _
    $region23: #{cnn_net_forward.1} parent=1 // pred_check_branch
      %26 = sbr.rel (0) target = $region25
    $region24: #{cnn_net_forward.1} parent=1 // pred_region
      _
    $region25: #{cnn_net_forward.1} parent=1 // pred_fallthru
      _
    // Predicated region
    $region26: #{cnn_net_forward.1} parent=1 // pred_check
      _
    $region27: #{cnn_net_forward.1} parent=1 // pred_check_branch
      %28 = sbr.rel (0) target = $region29
    $region28: #{cnn_net_forward.1} parent=1 // pred_region
      _
    $region29: #{cnn_net_forward.1} parent=1 // pred_fallthru
      _
    // Predicated region
    $region30: #{cnn_net_forward.1} parent=1 // pred_check
      _
    $region31: #{cnn_net_forward.1} parent=1 // pred_check_branch
      %30 = sbr.rel (0) target = $region33
    $region32: #{cnn_net_forward.1} parent=1 // pred_region
      _
    $region33: #{cnn_net_forward.1} parent=1 // pred_fallthru
      _
    // Predicated region
    $region34: #{cnn_net_forward.1} parent=1 // pred_check
      _
    $region35: #{cnn_net_forward.1} parent=1 // pred_check_branch
      %32 = sbr.rel (0) target = $region37
    $region36: #{cnn_net_forward.1} parent=1 // pred_region
      _
    $region37: #{cnn_net_forward.1} parent=1 // pred_fallthru
      _
    %v34 = vld [vmem:[%s0] sm:$0xff]
    %v35 = vld [vmem:[%s0 + $0x8] sm:$0xff]
    %v36 = vld [vmem:[%s0 + $0x10] sm:$0xff]
    %v37 = vld [vmem:[%s0 + $0x18] sm:$0xf]
    %v38 = vld [vmem:[%s0 + $0x20] sm:$0xff]
    %v39 = vld [vmem:[%s0 + $0x28] sm:$0xff]
    %v40 = vld [vmem:[%s0 + $0x30] sm:$0xff]
    %v41 = vld [vmem:[%s0 + $0x38] sm:$0xf]
    %vm50 = vcmask 1046528
    %v51 = vrot.slane %v34, 1
    %v52 = vrot.slane %v35, 1
    %v53 = vsel %vm50, %v51, %v52
    %v54 = vrot.slane %v36, 1
    %v55 = vsel %vm50, %v52, %v54
    %v56 = vrot.slane %v37, 1
    %v57 = vsel %vm50, %v54, %v56
    %v58 = vrot.slane %v38, 1
    %v59 = vrot.slane %v39, 1
    %v60 = vsel %vm50, %v58, %v59
    %v61 = vrot.slane %v40, 1
    %v62 = vsel %vm50, %v59, %v61
    %v63 = vrot.slane %v41, 1
    %v64 = vsel %vm50, %v61, %v63
    %65 = vrot.lane.b32.xlu0 %v53, 28
    %v66 = vpop.permute.xlu0 %65
    %67 = vrot.lane.b32.xlu0 %v55, 28
    %v68 = vpop.permute.xlu0 %67
    %69 = vrot.lane.b32.xlu0 %v57, 28
    %v70 = vpop.permute.xlu0 %69
    %71 = vrot.lane.b32.xlu0 %v60, 28
    %v72 = vpop.permute.xlu0 %71
    %73 = vrot.lane.b32.xlu0 %v62, 28
    %v74 = vpop.permute.xlu0 %73
    %75 = vrot.lane.b32.xlu0 %v64, 28
    %v76 = vpop.permute.xlu0 %75
    %vm83 = vcmask 1045504
    %v84 = vrot.slane %v34, 2
    %v85 = vrot.slane %v35, 2
    %v86 = vsel %vm83, %v84, %v85
    %v87 = vrot.slane %v36, 2
    %v88 = vsel %vm83, %v85, %v87
    %v89 = vrot.slane %v37, 2
    %v90 = vsel %vm83, %v87, %v89
    %v91 = vrot.slane %v38, 2
    %v92 = vrot.slane %v39, 2
    %v93 = vsel %vm83, %v91, %v92
    %v94 = vrot.slane %v40, 2
    %v95 = vsel %vm83, %v92, %v94
    %v96 = vrot.slane %v41, 2
    %v97 = vsel %vm83, %v94, %v96
    %98 = vrot.lane.b32.xlu0 %v86, 56
    %v99 = vpop.permute.xlu0 %98
    %100 = vrot.lane.b32.xlu0 %v88, 56
    %v101 = vpop.permute.xlu0 %100
    %102 = vrot.lane.b32.xlu0 %v90, 56
    %v103 = vpop.permute.xlu0 %102
    %104 = vrot.lane.b32.xlu0 %v93, 56
    %v105 = vpop.permute.xlu0 %104
    %106 = vrot.lane.b32.xlu0 %v95, 56
    %v107 = vpop.permute.xlu0 %106
    %108 = vrot.lane.b32.xlu0 %v97, 56
    %v109 = vpop.permute.xlu0 %108
    %vm116 = vcmask 1044480
    %v117 = vrot.slane %v34, 3
    %v118 = vrot.slane %v35, 3
    %v119 = vsel %vm116, %v117, %v118
    %v120 = vrot.slane %v36, 3
    %v121 = vsel %vm116, %v118, %v120
    %v122 = vrot.slane %v37, 3
    %v123 = vsel %vm116, %v120, %v122
    %v124 = vrot.slane %v38, 3
    %v125 = vrot.slane %v39, 3
    %v126 = vsel %vm116, %v124, %v125
    %v127 = vrot.slane %v40, 3
    %v128 = vsel %vm116, %v125, %v127
    %v129 = vrot.slane %v41, 3
    %v130 = vsel %vm116, %v127, %v129
    %131 = vrot.lane.b32.xlu0 %v119, 84
    %v132 = vpop.permute.xlu0 %131
    %133 = vrot.lane.b32.xlu0 %v121, 84
    %v134 = vpop.permute.xlu0 %133
    %135 = vrot.lane.b32.xlu0 %v123, 84
    %v136 = vpop.permute.xlu0 %135
    %137 = vrot.lane.b32.xlu0 %v126, 84
    %v138 = vpop.permute.xlu0 %137
    %139 = vrot.lane.b32.xlu0 %v128, 84
    %v140 = vpop.permute.xlu0 %139
    %141 = vrot.lane.b32.xlu0 %v130, 84
    %v142 = vpop.permute.xlu0 %141
    %vm149 = vcmask 1043456
    %v150 = vrot.slane %v34, 4
    %v151 = vrot.slane %v35, 4
    %v152 = vsel %vm149, %v150, %v151
    %v153 = vrot.slane %v36, 4
    %v154 = vsel %vm149, %v151, %v153
    %v155 = vrot.slane %v37, 4
    %v156 = vsel %vm149, %v153, %v155
    %v157 = vrot.slane %v38, 4
    %v158 = vrot.slane %v39, 4
    %v159 = vsel %vm149, %v157, %v158
    %v160 = vrot.slane %v40, 4
    %v161 = vsel %vm149, %v158, %v160
    %v162 = vrot.slane %v41, 4
    %v163 = vsel %vm149, %v160, %v162
    %164 = vrot.lane.b32.xlu0 %v152, 112
    %v165 = vpop.permute.xlu0 %164
    %166 = vrot.lane.b32.xlu0 %v154, 112
    %v167 = vpop.permute.xlu0 %166
    %168 = vrot.lane.b32.xlu0 %v156, 112
    %v169 = vpop.permute.xlu0 %168
    %170 = vrot.lane.b32.xlu0 %v159, 112
    %v171 = vpop.permute.xlu0 %170
    %172 = vrot.lane.b32.xlu0 %v161, 112
    %v173 = vpop.permute.xlu0 %172
    %174 = vrot.lane.b32.xlu0 %v163, 112
    %v175 = vpop.permute.xlu0 %174
    %vm182 = vcmask 228352
    %v183 = vsel %vm182, %v34, %v66
    %v184 = vsel %vm182, %v35, %v68
    %v185 = vsel %vm182, %v36, %v70
    %v186 = vsel %vm182, %v38, %v72
    %v187 = vsel %vm182, %v39, %v74
    %v188 = vsel %vm182, %v40, %v76
    %vm189 = vcmask 457728
    %v190 = vsel %vm189, %v183, %v99
    %v191 = vsel %vm189, %v184, %v101
    %v192 = vsel %vm189, %v185, %v103
    %v193 = vsel %vm189, %v186, %v105
    %v194 = vsel %vm189, %v187, %v107
    %v195 = vsel %vm189, %v188, %v109
    %vm196 = vcmask 687104
    %v197 = vsel %vm196, %v190, %v132
    %v198 = vsel %vm196, %v191, %v134
    %v199 = vsel %vm196, %v192, %v136
    %v200 = vsel %vm196, %v193, %v138
    %v201 = vsel %vm196, %v194, %v140
    %v202 = vsel %vm196, %v195, %v142
    %vm203 = vcmask 916480
    %v204 = vsel %vm203, %v197, %v165
    %v205 = vsel %vm203, %v198, %v167
    %v206 = vsel %vm203, %v199, %v169
    %v207 = vsel %vm203, %v200, %v171
    %v208 = vsel %vm203, %v201, %v173
    %v209 = vsel %vm203, %v202, %v175
    %v210 = vpack.c.bf16 %v205, %v204
    %v211 = vpack.c.bf16 %v167, %v165
    %v212 = vpack.c.bf16 %v207, %v206
    %v213 = vpack.c.bf16 %v171, %v169
    %v214 = vpack.c.bf16 %v209, %v208
    %v215 = vpack.c.bf16 %v175, %v173
    %v216 = vld [vmem:[%s1] sm:$0xff]
    %v217 = vld [vmem:[%s1 + $0x8] sm:$0xff]
    %v218 = vld [vmem:[%s1 + $0x10] sm:$0xff]
    %v219 = vld [vmem:[%s1 + $0x18] sm:$0xff]
    %v220 = vld [vmem:[%s1 + $0x20] sm:$0xff]
    %v221 = vld [vmem:[%s1 + $0x28] sm:$0xff]
    %v222 = vld [vmem:[%s1 + $0x30] sm:$0xff]
    %v223 = vld [vmem:[%s1 + $0x38] sm:$0xff]
    %v224 = vld [vmem:[%s1 + $0x40] sm:$0xff]
    %v225 = vld [vmem:[%s1 + $0x48] sm:$0xff]
    %v226 = vld [vmem:[%s1 + $0x50] sm:$0xff]
    %v227 = vld [vmem:[%s1 + $0x58] sm:$0xff]
    %v228 = vld [vmem:[%s1 + $0x60] sm:$0xff]
    %v229 = vld [vmem:[%s1 + $0x68] sm:$0xff]
    %v230 = vld [vmem:[%s1 + $0x70] sm:$0xff]
    %v231 = vld [vmem:[%s1 + $0x78] sm:$0xff]
    %v232 = vld [vmem:[%s1 + $0x80] sm:$0xff]
    %v233 = vld [vmem:[%s1 + $0x88] sm:$0x33]
    %v252 = vunpack.c.l.b16 %v216
    %v253 = vunpack.c.h.b16 %v216
    %v254 = vunpack.c.l.b16 %v217
    %v255 = vunpack.c.h.b16 %v217
    %v256 = vunpack.c.l.b16 %v218
    %v257 = vunpack.c.h.b16 %v218
    %v258 = vunpack.c.l.b16 %v219
    %v259 = vunpack.c.h.b16 %v219
    %v260 = vunpack.c.l.b16 %v220
    %v261 = vunpack.c.h.b16 %v220
    %v262 = vunpack.c.l.b16 %v221
    %v263 = vunpack.c.h.b16 %v221
    %v264 = vunpack.c.l.b16 %v222
    %v265 = vunpack.c.h.b16 %v222
    %v266 = vunpack.c.l.b16 %v223
    %v267 = vunpack.c.h.b16 %v223
    %v268 = vunpack.c.l.b16 %v224
    %v269 = vunpack.c.h.b16 %v224
    %v270 = vunpack.c.l.b16 %v225
    %v271 = vunpack.c.h.b16 %v225
    %v272 = vunpack.c.l.b16 %v226
    %v273 = vunpack.c.h.b16 %v226
    %v274 = vunpack.c.l.b16 %v227
    %v275 = vunpack.c.h.b16 %v227
    %v276 = vunpack.c.l.b16 %v228
    %v277 = vunpack.c.h.b16 %v228
    %v278 = vunpack.c.l.b16 %v229
    %v279 = vunpack.c.h.b16 %v229
    %v280 = vunpack.c.l.b16 %v230
    %v281 = vunpack.c.h.b16 %v230
    %v282 = vunpack.c.l.b16 %v231
    %v283 = vunpack.c.h.b16 %v231
    %v284 = vunpack.c.l.b16 %v232
    %v285 = vunpack.c.h.b16 %v232
    %v286 = vunpack.c.l.b16 %v233
    %v287 = vunpack.c.h.b16 %v233
    %v288 = vpack.c.b16 %v254, %v252
    %v289 = vpack.c.b16 %v255, %v253
    %v290 = vpack.c.b16 %v258, %v256
    %v291 = vpack.c.b16 %v259, %v257
    %v292 = vpack.c.b16 %v262, %v260
    %v293 = vpack.c.b16 %v263, %v261
    %v294 = vpack.c.b16 %v266, %v264
    %v295 = vpack.c.b16 %v267, %v265
    %v296 = vpack.c.b16 %v270, %v268
    %v297 = vpack.c.b16 %v271, %v269
    %v298 = vpack.c.b16 %v274, %v272
    %v299 = vpack.c.b16 %v275, %v273
    %v300 = vpack.c.b16 %v278, %v276
    %v301 = vpack.c.b16 %v279, %v277
    %v302 = vpack.c.b16 %v282, %v280
    %v303 = vpack.c.b16 %v283, %v281
    %v304 = vpack.c.b16 %v286, %v284
    %v305 = vpack.c.b16 %v287, %v285
    %vm322 = vcmask 97280
    %v324 = vsel %vm322, %v211, 0
    %v327 = vsel %vm322, %v213, 0
    %v330 = vsel %vm322, %v215, 0
    %v333 = vsel %vm83, %v304, 0
    %v336 = vsel %vm83, %v305, 0
    %338 = vmatprep.subr.bf16.mxu0 %v303
    %339 = vmatpush1.bf16.msra.mxu0 %v302
    %340 = vmatprep.subr.bf16.mxu0 %v301
    %341 = vmatpush1.bf16.msra.mxu0 %v300
    %342 = vmatprep.subr.bf16.mxu0 %v299
    %343 = vmatpush1.bf16.msra.mxu0 %v298
    %344 = vmatprep.subr.bf16.mxu0 %v297
    %345 = vmatpush1.bf16.msra.mxu0 %v296
    %346 = vmatprep.subr.bf16.mxu0 %v295
    %347 = vmatpush1.bf16.msra.mxu0 %v294
    %348 = vmatprep.subr.bf16.mxu0 %v293
    %349 = vmatpush1.bf16.msra.mxu0 %v292
    %350 = vmatprep.subr.bf16.mxu0 %v291
    %351 = vmatpush1.bf16.msra.mxu0 %v290
    %352 = vmatprep.subr.bf16.mxu0 %v289
    %353 = vmatpush1.bf16.msra.mxu0 %v288
    %354 = vmatprep.subr.bf16.mxu0 0
    %355 = vmatpush2.bf16.msra.mxu0 0
    %356 = vmatprep.subr.bf16.mxu0 0
    %357 = vmatpush2.bf16.msra.mxu0 0
    %358 = vmatprep.subr.bf16.mxu0 0
    %359 = vmatpush2.bf16.msra.mxu0 0
    %360 = vmatprep.subr.bf16.mxu0 0
    %361 = vmatpush2.bf16.msra.mxu0 0
    %362 = vmatprep.subr.bf16.mxu0 0
    %363 = vmatpush2.bf16.msra.mxu0 0
    %364 = vmatprep.subr.bf16.mxu0 0
    %365 = vmatpush2.bf16.msra.mxu0 0
    %366 = vmatprep.subr.bf16.mxu0 0
    %367 = vmatpush2.bf16.msra.mxu0 0
    %368 = vmatprep.subr.bf16.mxu0 %v336
    %369 = vmatpush2.bf16.msra.mxu0 %v333
    %370 = vmatprep.mubr.bf16.mxu0 %v324
    %371 = vmatmul.mubr.bf16.gmra.mxu0 %v210
    %v372 = vpop.f32.mrf.mxu0
    %v373 = vadd.f32 0.0, %v372
    %v374 = vpop.f32.mrf.mxu0
    %v375 = vadd.f32 0.0, %v374
    %v376 = vpop.f32.mrf.mxu0
    %v377 = vadd.f32 0.0, %v376
    %v378 = vpop.f32.mrf.mxu0
    %v379 = vadd.f32 0.0, %v378
    %380 = vmatprep.mubr.bf16.mxu0 %v327
    %381 = vmatmul.mubr.bf16.gmra.mxu0 %v212
    %v382 = vpop.f32.mrf.mxu0
    %v383 = vadd.f32 0.0, %v382
    %v384 = vpop.f32.mrf.mxu0
    %v385 = vadd.f32 0.0, %v384
    %v386 = vpop.f32.mrf.mxu0
    %v387 = vadd.f32 0.0, %v386
    %v388 = vpop.f32.mrf.mxu0
    %v389 = vadd.f32 0.0, %v388
    %390 = vmatprep.mubr.bf16.mxu0 %v330
    %391 = vmatmul.mubr.bf16.gmra.mxu0 %v214
    %v392 = vpop.f32.mrf.mxu0
    %v393 = vadd.f32 0.0, %v392
    %v394 = vpop.f32.mrf.mxu0
    %v395 = vadd.f32 0.0, %v394
    %v396 = vpop.f32.mrf.mxu0
    %v397 = vadd.f32 0.0, %v396
    %v398 = vpop.f32.mrf.mxu0
    %v399 = vadd.f32 0.0, %v398
    %400 = vdwg.mxu0
    %v401 = vld [vmem:[%s2] sm:$0x3]
    %v403 = vlaneseq
    %v404 = vshrl.u32 %v403, 7
    %v405 = vsub.s32 0, %v404
    %v406 = vrot.slane %v401, %v405
    %v407 = vlaneseq
    %v408 = vshrl.u32 %v407, 7
    %v409 = vsub.s32 1, %v408
    %v410 = vrot.slane %v401, %v409
    %v413 = vadd.f32 %v373, %v406
    %v414 = vadd.f32 %v375, %v410
    %v415 = vadd.f32 %v377, %v406
    %v416 = vadd.f32 %v379, %v410
    %v417 = vadd.f32 %v383, %v406
    %v418 = vadd.f32 %v385, %v410
    %v419 = vadd.f32 %v387, %v406
    %v420 = vadd.f32 %v389, %v410
    %v421 = vadd.f32 %v393, %v406
    %v422 = vadd.f32 %v395, %v410
    %v423 = vadd.f32 %v397, %v406
    %v424 = vadd.f32 %v399, %v410
    %v425 = vmax.f32 %v413, 0.0
    %v426 = vmax.f32 %v414, 0.0
    %v427 = vmax.f32 %v415, 0.0
    %v428 = vmax.f32 %v416, 0.0
    %v429 = vmax.f32 %v417, 0.0
    %v430 = vmax.f32 %v418, 0.0
    %v431 = vmax.f32 %v419, 0.0
    %v432 = vmax.f32 %v420, 0.0
    %v433 = vmax.f32 %v421, 0.0
    %v434 = vmax.f32 %v422, 0.0
    %v435 = vmax.f32 %v423, 0.0
    %v436 = vmax.f32 %v424, 0.0
    %449 = vrot.lane.b32.xlu0 %v425, 8
    %v450 = vpop.permute.xlu0 %449
    %451 = vrot.lane.b32.xlu0 %v426, 8
    %v452 = vpop.permute.xlu0 %451
    %453 = vrot.lane.b32.xlu0 %v427, 8
    %v454 = vpop.permute.xlu0 %453
    %455 = vrot.lane.b32.xlu0 %v428, 8
    %v456 = vpop.permute.xlu0 %455
    %457 = vrot.lane.b32.xlu0 %v429, 8
    %v458 = vpop.permute.xlu0 %457
    %459 = vrot.lane.b32.xlu0 %v430, 8
    %v460 = vpop.permute.xlu0 %459
    %461 = vrot.lane.b32.xlu0 %v431, 8
    %v462 = vpop.permute.xlu0 %461
    %463 = vrot.lane.b32.xlu0 %v432, 8
    %v464 = vpop.permute.xlu0 %463
    %465 = vrot.lane.b32.xlu0 %v433, 8
    %v466 = vpop.permute.xlu0 %465
    %467 = vrot.lane.b32.xlu0 %v434, 8
    %v468 = vpop.permute.xlu0 %467
    %469 = vrot.lane.b32.xlu0 %v435, 8
    %v470 = vpop.permute.xlu0 %469
    %471 = vrot.lane.b32.xlu0 %v436, 8
    %v472 = vpop.permute.xlu0 %471
    %vm473 = vcmask 64512
    %v474 = vsel %vm473, %v450, %v452
    %v475 = vsel %vm473, %v454, %v456
    %v476 = vsel %vm473, %v458, %v460
    %v477 = vsel %vm473, %v462, %v464
    %v478 = vsel %vm473, %v466, %v468
    %v479 = vsel %vm473, %v470, %v472
    %v486 = vmax.f32 %v425, %v474
    %v487 = vmax.f32 %v427, %v475
    %v488 = vmax.f32 %v429, %v476
    %v489 = vmax.f32 %v431, %v477
    %v490 = vmax.f32 %v433, %v478
    %v491 = vmax.f32 %v435, %v479
    %vm492 = vcmask 982016
    %493 = vst.msk [vmem:[#allocation2] sm:$0xff] %vm492, %v486
    %494 = vst.msk [vmem:[#allocation2 + $0x8] sm:$0xff] %vm492, %v487
    %495 = vst.msk [vmem:[#allocation2 + $0x10] sm:$0xff] %vm492, %v488
    %496 = vst.msk [vmem:[#allocation2 + $0x18] sm:$0xff] %vm492, %v489
    %497 = vst.msk [vmem:[#allocation2 + $0x20] sm:$0xff] %vm492, %v490
    %498 = vst.msk [vmem:[#allocation2 + $0x28] sm:$0xff] %vm492, %v491
    %v499 = vld [vmem:[#allocation2] ss:$2 sm:$0xff]
    %s500 = scalar_lea.vmem [#allocation2], 16
    %v501 = vld [vmem:[%s500] ss:$2 sm:$0xf]
    %s502 = scalar_lea.vmem [#allocation2], 24
    %v503 = vld [vmem:[%s502] ss:$2 sm:$0xff]
    %s504 = scalar_lea.vmem [#allocation2], 40
    %v505 = vld [vmem:[%s504] ss:$2 sm:$0xf]
    %s506 = scalar_lea.vmem [#allocation2], 1
    %v507 = vld [vmem:[%s506] ss:$2 sm:$0xff]
    %s508 = scalar_lea.vmem [#allocation2], 17
    %v509 = vld [vmem:[%s508] ss:$2 sm:$0xf]
    %s510 = scalar_lea.vmem [#allocation2], 25
    %v511 = vld [vmem:[%s510] ss:$2 sm:$0xff]
    %s512 = scalar_lea.vmem [#allocation2], 41
    %v513 = vld [vmem:[%s512] ss:$2 sm:$0xf]
    %v514 = vmax.f32 %v499, %v507
    %v515 = vmax.f32 %v501, %v509
    %v516 = vmax.f32 %v503, %v511
    %v517 = vmax.f32 %v505, %v513
    %v522 = vrot.slane %v514, 1
    %v523 = vrot.slane %v515, 1
    %v524 = vsel %vm50, %v522, %v523
    %v525 = vrot.slane %v516, 1
    %v526 = vrot.slane %v517, 1
    %v527 = vsel %vm50, %v525, %v526
    %528 = vrot.lane.b32.xlu0 %v524, 120
    %v529 = vpop.permute.xlu0 %528
    %530 = vrot.lane.b32.xlu0 %v527, 120
    %v531 = vpop.permute.xlu0 %530
    %v534 = vrot.slane %v514, 2
    %v535 = vrot.slane %v515, 2
    %v536 = vsel %vm83, %v534, %v535
    %v537 = vrot.slane %v516, 2
    %v538 = vrot.slane %v517, 2
    %v539 = vsel %vm83, %v537, %v538
    %540 = vrot.lane.b32.xlu0 %v536, 112
    %v541 = vpop.permute.xlu0 %540
    %542 = vrot.lane.b32.xlu0 %v539, 112
    %v543 = vpop.permute.xlu0 %542
    %v546 = vrot.slane %v514, 3
    %v547 = vrot.slane %v515, 3
    %v548 = vsel %vm116, %v546, %v547
    %v549 = vrot.slane %v516, 3
    %v550 = vrot.slane %v517, 3
    %v551 = vsel %vm116, %v549, %v550
    %552 = vrot.lane.b32.xlu0 %v548, 104
    %v553 = vpop.permute.xlu0 %552
    %554 = vrot.lane.b32.xlu0 %v551, 104
    %v555 = vpop.permute.xlu0 %554
    %v558 = vrot.slane %v514, 4
    %v559 = vrot.slane %v515, 4
    %v560 = vsel %vm149, %v558, %v559
    %v561 = vrot.slane %v516, 4
    %v562 = vrot.slane %v517, 4
    %v563 = vsel %vm149, %v561, %v562
    %564 = vrot.lane.b32.xlu0 %v560, 96
    %v565 = vpop.permute.xlu0 %564
    %566 = vrot.lane.b32.xlu0 %v563, 96
    %v567 = vpop.permute.xlu0 %566
    %v570 = vsel %vm492, %v514, %v529
    %v571 = vsel %vm492, %v516, %v531
    %v572 = vsel %vm203, %v529, %v541
    %v573 = vsel %vm203, %v531, %v543
    %vm574 = vcmask 850944
    %v575 = vsel %vm574, %v541, %v553
    %v576 = vsel %vm574, %v543, %v555
    %vm577 = vcmask 785408
    %v578 = vsel %vm577, %v553, %v565
    %v579 = vsel %vm577, %v555, %v567
    %v580 = vpack.c.bf16 %v571, %v570
    %v581 = vpack.c.bf16 %v573, %v572
    %v582 = vpack.c.bf16 %v576, %v575
    %v583 = vpack.c.bf16 %v579, %v578
    %v584 = vpack.c.bf16 %v567, %v565
    %v585 = vld [vmem:[%s3] sm:$0xf]
    %v586 = vld [vmem:[%s3 + $0x4] sm:$0xf]
    %v587 = vld [vmem:[%s3 + $0x8] sm:$0xf]
    %v588 = vld [vmem:[%s3 + $0xc] sm:$0xf]
    %v589 = vld [vmem:[%s3 + $0x10] sm:$0xf]
    %v590 = vld [vmem:[%s3 + $0x14] sm:$0xf]
    %v591 = vld [vmem:[%s3 + $0x18] sm:$0xf]
    %v592 = vld [vmem:[%s3 + $0x1c] sm:$0xf]
    %v593 = vld [vmem:[%s3 + $0x20] sm:$0xf]
    %v594 = vld [vmem:[%s3 + $0x24] sm:$0xf]
    %v595 = vld [vmem:[%s3 + $0x28] sm:$0xf]
    %v596 = vld [vmem:[%s3 + $0x2c] sm:$0xf]
    %v597 = vld [vmem:[%s3 + $0x30] sm:$0xf]
    %v598 = vld [vmem:[%s3 + $0x34] sm:$0xf]
    %v599 = vld [vmem:[%s3 + $0x38] sm:$0xf]
    %v600 = vld [vmem:[%s3 + $0x3c] sm:$0xf]
    %v601 = vld [vmem:[%s3 + $0x40] sm:$0xf]
    %v602 = vld [vmem:[%s3 + $0x44] sm:$0xf]
    %v603 = vld [vmem:[%s3 + $0x48] sm:$0xf]
    %v604 = vld [vmem:[%s3 + $0x4c] sm:$0xf]
    %v605 = vld [vmem:[%s3 + $0x50] sm:$0xf]
    %v606 = vld [vmem:[%s3 + $0x54] sm:$0xf]
    %v607 = vld [vmem:[%s3 + $0x58] sm:$0xf]
    %v608 = vld [vmem:[%s3 + $0x5c] sm:$0xf]
    %v609 = vld [vmem:[%s3 + $0x60] sm:$0xf]
    %v610 = vld [vmem:[%s3 + $0x64] sm:$0xf]
    %v611 = vld [vmem:[%s3 + $0x68] sm:$0xf]
    %v612 = vld [vmem:[%s3 + $0x6c] sm:$0xf]
    %v613 = vld [vmem:[%s3 + $0x70] sm:$0xf]
    %v614 = vld [vmem:[%s3 + $0x74] sm:$0xf]
    %v615 = vld [vmem:[%s3 + $0x78] sm:$0xf]
    %v616 = vld [vmem:[%s3 + $0x7c] sm:$0xf]
    %v617 = vld [vmem:[%s3 + $0x80] sm:$0xf]
    %v618 = vld [vmem:[%s3 + $0x84] sm:$0xf]
    %v619 = vld [vmem:[%s3 + $0x88] sm:$0xf]
    %v620 = vld [vmem:[%s3 + $0x8c] sm:$0xf]
    %v621 = vld [vmem:[%s3 + $0x90] sm:$0xf]
    %v622 = vld [vmem:[%s3 + $0x94] sm:$0xf]
    %v623 = vld [vmem:[%s3 + $0x98] sm:$0xf]
    %v624 = vld [vmem:[%s3 + $0x9c] sm:$0xf]
    %v625 = vld [vmem:[%s3 + $0xa0] sm:$0xf]
    %v626 = vld [vmem:[%s3 + $0xa4] sm:$0xf]
    %v627 = vld [vmem:[%s3 + $0xa8] sm:$0xf]
    %v628 = vld [vmem:[%s3 + $0xac] sm:$0xf]
    %v629 = vld [vmem:[%s3 + $0xb0] sm:$0xf]
    %v630 = vld [vmem:[%s3 + $0xb4] sm:$0xf]
    %v631 = vld [vmem:[%s3 + $0xb8] sm:$0xf]
    %v632 = vld [vmem:[%s3 + $0xbc] sm:$0xf]
    %v633 = vld [vmem:[%s3 + $0xc0] sm:$0xf]
    %v634 = vld [vmem:[%s3 + $0xc4] sm:$0xf]
    %v635 = vld [vmem:[%s3 + $0xc8] sm:$0xf]
    %v636 = vld [vmem:[%s3 + $0xcc] sm:$0xf]
    %v637 = vld [vmem:[%s3 + $0xd0] sm:$0xf]
    %v638 = vld [vmem:[%s3 + $0xd4] sm:$0xf]
    %v639 = vld [vmem:[%s3 + $0xd8] sm:$0xf]
    %v640 = vld [vmem:[%s3 + $0xdc] sm:$0xf]
    %v641 = vld [vmem:[%s3 + $0xe0] sm:$0xf]
    %v642 = vld [vmem:[%s3 + $0xe4] sm:$0xf]
    %v643 = vld [vmem:[%s3 + $0xe8] sm:$0xf]
    %v644 = vld [vmem:[%s3 + $0xec] sm:$0xf]
    %v645 = vld [vmem:[%s3 + $0xf0] sm:$0xf]
    %v646 = vld [vmem:[%s3 + $0xf4] sm:$0xf]
    %v647 = vld [vmem:[%s3 + $0xf8] sm:$0xf]
    %v648 = vld [vmem:[%s3 + $0xfc] sm:$0xf]
    %v649 = vld [vmem:[%s3 + $0x100] sm:$0xf]
    %v650 = vld [vmem:[%s3 + $0x104] sm:$0xf]
    %v651 = vld [vmem:[%s3 + $0x108] sm:$0xf]
    %v652 = vld [vmem:[%s3 + $0x10c] sm:$0xf]
    %v653 = vld [vmem:[%s3 + $0x110] sm:$0xf]
    %v654 = vld [vmem:[%s3 + $0x114] sm:$0xf]
    %v655 = vld [vmem:[%s3 + $0x118] sm:$0xf]
    %v656 = vld [vmem:[%s3 + $0x11c] sm:$0xf]
    %v657 = vld [vmem:[%s3 + $0x120] sm:$0xf]
    %v658 = vld [vmem:[%s3 + $0x124] sm:$0xf]
    %v659 = vld [vmem:[%s3 + $0x128] sm:$0xf]
    %v735 = vunpack.c.l.b16 %v585
    %v736 = vunpack.c.l.b16 %v586
    %v737 = vunpack.c.l.b16 %v587
    %v738 = vunpack.c.l.b16 %v588
    %v739 = vunpack.c.l.b16 %v589
    %v740 = vunpack.c.l.b16 %v590
    %v741 = vunpack.c.l.b16 %v591
    %v742 = vunpack.c.l.b16 %v592
    %v743 = vunpack.c.l.b16 %v593
    %v744 = vunpack.c.l.b16 %v594
    %v745 = vunpack.c.l.b16 %v595
    %v746 = vunpack.c.l.b16 %v596
    %v747 = vunpack.c.l.b16 %v597
    %v748 = vunpack.c.l.b16 %v598
    %v749 = vunpack.c.l.b16 %v599
    %v750 = vunpack.c.l.b16 %v600
    %v751 = vunpack.c.l.b16 %v601
    %v752 = vunpack.c.l.b16 %v602
    %v753 = vunpack.c.l.b16 %v603
    %v754 = vunpack.c.l.b16 %v604
    %v755 = vunpack.c.l.b16 %v605
    %v756 = vunpack.c.l.b16 %v606
    %v757 = vunpack.c.l.b16 %v607
    %v758 = vunpack.c.l.b16 %v608
    %v759 = vunpack.c.l.b16 %v609
    %v760 = vunpack.c.l.b16 %v610
    %v761 = vunpack.c.l.b16 %v611
    %v762 = vunpack.c.l.b16 %v612
    %v763 = vunpack.c.l.b16 %v613
    %v764 = vunpack.c.l.b16 %v614
    %v765 = vunpack.c.l.b16 %v615
    %v766 = vunpack.c.l.b16 %v616
    %v767 = vunpack.c.l.b16 %v617
    %v768 = vunpack.c.l.b16 %v618
    %v769 = vunpack.c.l.b16 %v619
    %v770 = vunpack.c.l.b16 %v620
    %v771 = vunpack.c.l.b16 %v621
    %v772 = vunpack.c.l.b16 %v622
    %v773 = vunpack.c.l.b16 %v623
    %v774 = vunpack.c.l.b16 %v624
    %v775 = vunpack.c.l.b16 %v625
    %v776 = vunpack.c.l.b16 %v626
    %v777 = vunpack.c.l.b16 %v627
    %v778 = vunpack.c.l.b16 %v628
    %v779 = vunpack.c.l.b16 %v629
    %v780 = vunpack.c.l.b16 %v630
    %v781 = vunpack.c.l.b16 %v631
    %v782 = vunpack.c.l.b16 %v632
    %v783 = vunpack.c.l.b16 %v633
    %v784 = vunpack.c.l.b16 %v634
    %v785 = vunpack.c.l.b16 %v635
    %v786 = vunpack.c.l.b16 %v636
    %v787 = vunpack.c.l.b16 %v637
    %v788 = vunpack.c.l.b16 %v638
    %v789 = vunpack.c.l.b16 %v639
    %v790 = vunpack.c.l.b16 %v640
    %v791 = vunpack.c.l.b16 %v641
    %v792 = vunpack.c.l.b16 %v642
    %v793 = vunpack.c.l.b16 %v643
    %v794 = vunpack.c.l.b16 %v644
    %v795 = vunpack.c.l.b16 %v645
    %v796 = vunpack.c.l.b16 %v646
    %v797 = vunpack.c.l.b16 %v647
    %v798 = vunpack.c.l.b16 %v648
    %v799 = vunpack.c.l.b16 %v649
    %v800 = vunpack.c.l.b16 %v650
    %v801 = vunpack.c.l.b16 %v651
    %v802 = vunpack.c.l.b16 %v652
    %v803 = vunpack.c.l.b16 %v653
    %v804 = vunpack.c.l.b16 %v654
    %v805 = vunpack.c.l.b16 %v655
    %v806 = vunpack.c.l.b16 %v656
    %v807 = vunpack.c.l.b16 %v657
    %v808 = vunpack.c.l.b16 %v658
    %v809 = vunpack.c.l.b16 %v659
    %v810 = vpack.c.b16 %v736, %v735
    %v811 = vpack.c.b16 %v738, %v737
    %v812 = vpack.c.b16 %v740, %v739
    %v813 = vpack.c.b16 %v742, %v741
    %v814 = vpack.c.b16 %v744, %v743
    %v815 = vpack.c.b16 %v746, %v745
    %v816 = vpack.c.b16 %v748, %v747
    %v817 = vpack.c.b16 %v750, %v749
    %v818 = vpack.c.b16 %v752, %v751
    %v819 = vpack.c.b16 %v754, %v753
    %v820 = vpack.c.b16 %v756, %v755
    %v821 = vpack.c.b16 %v758, %v757
    %v822 = vpack.c.b16 %v760, %v759
    %v823 = vpack.c.b16 %v762, %v761
    %v824 = vpack.c.b16 %v764, %v763
    %v825 = vpack.c.b16 %v766, %v765
    %v826 = vpack.c.b16 %v768, %v767
    %v827 = vpack.c.b16 %v770, %v769
    %v828 = vpack.c.b16 %v772, %v771
    %v829 = vpack.c.b16 %v774, %v773
    %v830 = vpack.c.b16 %v776, %v775
    %v831 = vpack.c.b16 %v778, %v777
    %v832 = vpack.c.b16 %v780, %v779
    %v833 = vpack.c.b16 %v782, %v781
    %v834 = vpack.c.b16 %v784, %v783
    %v835 = vpack.c.b16 %v786, %v785
    %v836 = vpack.c.b16 %v788, %v787
    %v837 = vpack.c.b16 %v790, %v789
    %v838 = vpack.c.b16 %v792, %v791
    %v839 = vpack.c.b16 %v794, %v793
    %v840 = vpack.c.b16 %v796, %v795
    %v841 = vpack.c.b16 %v798, %v797
    %v842 = vpack.c.b16 %v800, %v799
    %v843 = vpack.c.b16 %v802, %v801
    %v844 = vpack.c.b16 %v804, %v803
    %v845 = vpack.c.b16 %v806, %v805
    %v846 = vpack.c.b16 %v808, %v807
    %v847 = vpack.c.b16 %v809, %v809
    %vm885 = vcmask 719872
    %v887 = vsel %vm885, %v584, 0
    %v890 = vsel %vm149, %v847, 0
    %892 = vmatprep.subr.bf16.mxu0 0
    %893 = vmatpush1.bf16.msra.mxu0 %v817
    %894 = vmatprep.subr.bf16.mxu0 0
    %895 = vmatpush1.bf16.msra.mxu0 %v816
    %896 = vmatprep.subr.bf16.mxu0 0
    %897 = vmatpush1.bf16.msra.mxu0 %v815
    %898 = vmatprep.subr.bf16.mxu0 0
    %899 = vmatpush1.bf16.msra.mxu0 %v814
    %900 = vmatprep.subr.bf16.mxu0 0
    %901 = vmatpush1.bf16.msra.mxu0 %v813
    %902 = vmatprep.subr.bf16.mxu0 0
    %903 = vmatpush1.bf16.msra.mxu0 %v812
    %904 = vmatprep.subr.bf16.mxu0 0
    %905 = vmatpush1.bf16.msra.mxu0 %v811
    %906 = vmatprep.subr.bf16.mxu0 0
    %907 = vmatpush1.bf16.msra.mxu0 %v810
    %908 = vmatprep.subr.bf16.mxu0 0
    %909 = vmatpush2.bf16.msra.mxu0 %v825
    %910 = vmatprep.subr.bf16.mxu0 0
    %911 = vmatpush2.bf16.msra.mxu0 %v824
    %912 = vmatprep.subr.bf16.mxu0 0
    %913 = vmatpush2.bf16.msra.mxu0 %v823
    %914 = vmatprep.subr.bf16.mxu0 0
    %915 = vmatpush2.bf16.msra.mxu0 %v822
    %916 = vmatprep.subr.bf16.mxu0 0
    %917 = vmatpush2.bf16.msra.mxu0 %v821
    %918 = vmatprep.subr.bf16.mxu0 0
    %919 = vmatpush2.bf16.msra.mxu0 %v820
    %920 = vmatprep.subr.bf16.mxu0 0
    %921 = vmatpush2.bf16.msra.mxu0 %v819
    %922 = vmatprep.subr.bf16.mxu0 0
    %923 = vmatpush2.bf16.msra.mxu0 %v818
    %924 = vmatprep.mubr.bf16.mxu0 %v581
    %925 = vmatmul.mubr.bf16.gmra.mxu0 %v580
    %v926 = vpop.f32.mrf.mxu0
    %v927 = vadd.f32 0.0, %v926
    %v928 = vpop.f32.mrf.mxu0
    %v929 = vpop.f32.mrf.mxu0
    %v930 = vadd.f32 0.0, %v929
    %v931 = vpop.f32.mrf.mxu0
    %932 = vdwg.mxu0
    %933 = vmatprep.subr.bf16.mxu0 0
    %934 = vmatpush1.bf16.msra.mxu0 %v833
    %935 = vmatprep.subr.bf16.mxu0 0
    %936 = vmatpush1.bf16.msra.mxu0 %v832
    %937 = vmatprep.subr.bf16.mxu0 0
    %938 = vmatpush1.bf16.msra.mxu0 %v831
    %939 = vmatprep.subr.bf16.mxu0 0
    %940 = vmatpush1.bf16.msra.mxu0 %v830
    %941 = vmatprep.subr.bf16.mxu0 0
    %942 = vmatpush1.bf16.msra.mxu0 %v829
    %943 = vmatprep.subr.bf16.mxu0 0
    %944 = vmatpush1.bf16.msra.mxu0 %v828
    %945 = vmatprep.subr.bf16.mxu0 0
    %946 = vmatpush1.bf16.msra.mxu0 %v827
    %947 = vmatprep.subr.bf16.mxu0 0
    %948 = vmatpush1.bf16.msra.mxu0 %v826
    %949 = vmatprep.subr.bf16.mxu0 0
    %950 = vmatpush2.bf16.msra.mxu0 %v841
    %951 = vmatprep.subr.bf16.mxu0 0
    %952 = vmatpush2.bf16.msra.mxu0 %v840
    %953 = vmatprep.subr.bf16.mxu0 0
    %954 = vmatpush2.bf16.msra.mxu0 %v839
    %955 = vmatprep.subr.bf16.mxu0 0
    %956 = vmatpush2.bf16.msra.mxu0 %v838
    %957 = vmatprep.subr.bf16.mxu0 0
    %958 = vmatpush2.bf16.msra.mxu0 %v837
    %959 = vmatprep.subr.bf16.mxu0 0
    %960 = vmatpush2.bf16.msra.mxu0 %v836
    %961 = vmatprep.subr.bf16.mxu0 0
    %962 = vmatpush2.bf16.msra.mxu0 %v835
    %963 = vmatprep.subr.bf16.mxu0 0
    %964 = vmatpush2.bf16.msra.mxu0 %v834
    %965 = vmatprep.mubr.bf16.mxu0 %v583
    %966 = vmatmul.mubr.bf16.gmra.mxu0 %v582
    %v967 = vpop.f32.mrf.mxu0
    %v968 = vadd.f32 %v927, %v967
    %v969 = vpop.f32.mrf.mxu0
    %v970 = vpop.f32.mrf.mxu0
    %v971 = vadd.f32 %v930, %v970
    %v972 = vpop.f32.mrf.mxu0
    %973 = vdwg.mxu0
    %974 = vmatprep.subr.bf16.mxu0 0
    %975 = vmatpush1.bf16.msra.mxu0 0
    %976 = vmatprep.subr.bf16.mxu0 0
    %977 = vmatpush1.bf16.msra.mxu0 0
    %978 = vmatprep.subr.bf16.mxu0 0
    %979 = vmatpush1.bf16.msra.mxu0 %v890
    %980 = vmatprep.subr.bf16.mxu0 0
    %981 = vmatpush1.bf16.msra.mxu0 %v846
    %982 = vmatprep.subr.bf16.mxu0 0
    %983 = vmatpush1.bf16.msra.mxu0 %v845
    %984 = vmatprep.subr.bf16.mxu0 0
    %985 = vmatpush1.bf16.msra.mxu0 %v844
    %986 = vmatprep.subr.bf16.mxu0 0
    %987 = vmatpush1.bf16.msra.mxu0 %v843
    %988 = vmatprep.subr.bf16.mxu0 0
    %989 = vmatpush1.bf16.msra.mxu0 %v842
    %990 = vmatprep.subr.bf16.mxu0 0
    %991 = vmatpush2.bf16.msra.mxu0 0
    %992 = vmatprep.subr.bf16.mxu0 0
    %993 = vmatpush2.bf16.msra.mxu0 0
    %994 = vmatprep.subr.bf16.mxu0 0
    %995 = vmatpush2.bf16.msra.mxu0 0
    %996 = vmatprep.subr.bf16.mxu0 0
    %997 = vmatpush2.bf16.msra.mxu0 0
    %998 = vmatprep.subr.bf16.mxu0 0
    %999 = vmatpush2.bf16.msra.mxu0 0
    %1000 = vmatprep.subr.bf16.mxu0 0
    %1001 = vmatpush2.bf16.msra.mxu0 0
    %1002 = vmatprep.subr.bf16.mxu0 0
    %1003 = vmatpush2.bf16.msra.mxu0 0
    %1004 = vmatprep.subr.bf16.mxu0 0
    %1005 = vmatpush2.bf16.msra.mxu0 0
    %1006 = vmatprep.mubr.bf16.mxu0 0
    %1007 = vmatmul.mubr.bf16.gmra.mxu0 %v887
    %v1008 = vpop.f32.mrf.mxu0
    %v1009 = vadd.f32 %v968, %v1008
    %v1010 = vpop.f32.mrf.mxu0
    %v1011 = vpop.f32.mrf.mxu0
    %v1012 = vadd.f32 %v971, %v1011
    %v1013 = vpop.f32.mrf.mxu0
    %1014 = vdwg.mxu0
    %v1015 = vld [vmem:[%s4] sm:$0x1]
    %v1017 = vlaneseq
    %v1018 = vshrl.u32 %v1017, 7
    %v1019 = vsub.s32 0, %v1018
    %v1020 = vrot.slane %v1015, %v1019
    %v1022 = vadd.f32 %v1009, %v1020
    %v1023 = vadd.f32 %v1012, %v1020
    %v1024 = vmax.f32 %v1022, 0.0
    %v1025 = vmax.f32 %v1023, 0.0
    %1028 = vrot.lane.b32.xlu0 %v1024, 88
    %v1029 = vpop.permute.xlu0 %1028
    %1030 = vrot.lane.b32.xlu0 %v1025, 88
    %v1031 = vpop.permute.xlu0 %1030
    %v1034 = vmax.f32 %v1024, %v1029
    %v1035 = vmax.f32 %v1025, %v1031
    %vm1036 = vcmask 326656
    %1037 = vst.msk [vmem:[#allocation3] sm:$0xff] %vm1036, %v1034
    %1038 = vst.msk [vmem:[#allocation3 + $0x8] sm:$0xff] %vm1036, %v1035
    %v1039 = vld [vmem:[#allocation3] ss:$2 sm:$0xf]
    %s1040 = scalar_lea.vmem [#allocation3], 8
    %v1041 = vld [vmem:[%s1040] ss:$2 sm:$0xf]
    %s1042 = scalar_lea.vmem [#allocation3], 1
    %v1043 = vld [vmem:[%s1042] ss:$2 sm:$0xf]
    %s1044 = scalar_lea.vmem [#allocation3], 9
    %v1045 = vld [vmem:[%s1044] ss:$2 sm:$0xf]
    %v1046 = vmax.f32 %v1039, %v1043
    %v1048 = vunpack.c.l.s4 1983009808
    %v1049 = vunpack.c.0.s8 %v1048
    %v1050 = vlaneseq
    %v1051 = vshrl.u32 %v1050, 7
    %v1052 = vsub.s32 %v1049, %v1051
    %v1053 = vrot.slane %v1046, %v1052
    %v1054 = vmax.f32 %v1041, %v1045
    %v1056 = vunpack.c.l.s4 1983009808
    %v1057 = vunpack.c.0.s8 %v1056
    %v1058 = vlaneseq
    %v1059 = vshrl.u32 %v1058, 7
    %v1060 = vsub.s32 %v1057, %v1059
    %v1061 = vrot.slane %v1054, %v1060
    %v1062 = vcombine.low %v1053, %v1061
    %v1063 = vcombine.high %v1053, %v1061
    %v1065 = vunpack.c.l.s4 1934713408
    %v1066 = vunpack.c.0.s8 %v1065
    %v1067 = vlaneseq
    %v1068 = vshrl.u32 %v1067, 7
    %v1069 = vsub.s32 %v1066, %v1068
    %v1070 = vrot.slane %v1062, %v1069
    %v1072 = vunpack.c.l.s4 1934713408
    %v1073 = vunpack.c.0.s8 %v1072
    %v1074 = vlaneseq
    %v1075 = vshrl.u32 %v1074, 7
    %v1076 = vsub.s32 %v1073, %v1075
    %v1077 = vrot.slane %v1063, %v1076
    %v1078 = vcombine.high %v1070, 0.0
    %v1079 = vcombine.high %v1077, 0.0
    %1081 = vrot.lane.b32.xlu0 %v1078, 40
    %v1082 = vpop.permute.xlu0 %1081
    %1085 = vrot.lane.b32.xlu0 %v1077, 80
    %v1086 = vpop.permute.xlu0 %1085
    %1089 = vrot.lane.b32.xlu0 %v1079, 120
    %v1090 = vpop.permute.xlu0 %1089
    %v1092 = vsel %vm1036, %v1070, %v1082
    %vm1093 = vcmask 654336
    %v1094 = vsel %vm1093, %v1092, %v1086
    %v1095 = vsel %vm492, %v1094, %v1090
    %v1096 = vpack.c.bf16 %v1095, %v1095
    %v1097 = vpack.c.bf16 %v1090, %v1090
    %v1098 = vld [vmem:[%s5] sm:$0xf]
    %v1099 = vld [vmem:[%s5 + $0x4] sm:$0xf]
    %v1100 = vld [vmem:[%s5 + $0x8] sm:$0xf]
    %v1101 = vld [vmem:[%s5 + $0xc] sm:$0xf]
    %v1102 = vld [vmem:[%s5 + $0x10] sm:$0xf]
    %v1103 = vld [vmem:[%s5 + $0x14] sm:$0xf]
    %v1104 = vld [vmem:[%s5 + $0x18] sm:$0xf]
    %v1105 = vld [vmem:[%s5 + $0x1c] sm:$0xf]
    %v1106 = vld [vmem:[%s5 + $0x20] sm:$0xf]
    %v1107 = vld [vmem:[%s5 + $0x24] sm:$0xf]
    %v1108 = vld [vmem:[%s5 + $0x28] sm:$0xf]
    %v1109 = vld [vmem:[%s5 + $0x2c] sm:$0xf]
    %v1110 = vld [vmem:[%s5 + $0x30] sm:$0xf]
    %v1111 = vld [vmem:[%s5 + $0x34] sm:$0xf]
    %v1112 = vld [vmem:[%s5 + $0x38] sm:$0xf]
    %v1113 = vld [vmem:[%s5 + $0x3c] sm:$0xf]
    %v1114 = vld [vmem:[%s5 + $0x40] sm:$0xf]
    %v1115 = vld [vmem:[%s5 + $0x44] sm:$0xf]
    %v1116 = vld [vmem:[%s5 + $0x48] sm:$0xf]
    %v1117 = vld [vmem:[%s5 + $0x4c] sm:$0xf]
    %v1118 = vld [vmem:[%s6] sm:$0x1]
    %v1120 = vlaneseq
    %v1121 = vshrl.u32 %v1120, 7
    %v1122 = vsub.s32 0, %v1121
    %v1123 = vrot.slane %v1118, %v1122
    %v1145 = vunpack.c.l.b16 %v1098
    %v1146 = vunpack.c.l.b16 %v1099
    %v1147 = vunpack.c.l.b16 %v1100
    %v1148 = vunpack.c.l.b16 %v1101
    %v1149 = vunpack.c.l.b16 %v1102
    %v1150 = vunpack.c.l.b16 %v1103
    %v1151 = vunpack.c.l.b16 %v1104
    %v1152 = vunpack.c.l.b16 %v1105
    %v1153 = vunpack.c.l.b16 %v1106
    %v1154 = vunpack.c.l.b16 %v1107
    %v1155 = vunpack.c.l.b16 %v1108
    %v1156 = vunpack.c.l.b16 %v1109
    %v1157 = vunpack.c.l.b16 %v1110
    %v1158 = vunpack.c.l.b16 %v1111
    %v1159 = vunpack.c.l.b16 %v1112
    %v1160 = vunpack.c.l.b16 %v1113
    %v1161 = vunpack.c.l.b16 %v1114
    %v1162 = vunpack.c.l.b16 %v1115
    %v1163 = vunpack.c.l.b16 %v1116
    %v1164 = vunpack.c.l.b16 %v1117
    %v1165 = vpack.c.b16 %v1146, %v1145
    %v1166 = vpack.c.b16 %v1148, %v1147
    %v1167 = vpack.c.b16 %v1150, %v1149
    %v1168 = vpack.c.b16 %v1152, %v1151
    %v1169 = vpack.c.b16 %v1154, %v1153
    %v1170 = vpack.c.b16 %v1156, %v1155
    %v1171 = vpack.c.b16 %v1158, %v1157
    %v1172 = vpack.c.b16 %v1160, %v1159
    %v1173 = vpack.c.b16 %v1162, %v1161
    %v1174 = vpack.c.b16 %v1164, %v1163
    %vm1185 = vcmask 261120
    %v1187 = vsel %vm1185, %v1097, 0
    %1189 = vmatprep.subr.bf16.mxu0 0
    %1190 = vmatpush1.bf16.msra.mxu0 %v1172
    %1191 = vmatprep.subr.bf16.mxu0 0
    %1192 = vmatpush1.bf16.msra.mxu0 %v1171
    %1193 = vmatprep.subr.bf16.mxu0 0
    %1194 = vmatpush1.bf16.msra.mxu0 %v1170
    %1195 = vmatprep.subr.bf16.mxu0 0
    %1196 = vmatpush1.bf16.msra.mxu0 %v1169
    %1197 = vmatprep.subr.bf16.mxu0 0
    %1198 = vmatpush1.bf16.msra.mxu0 %v1168
    %1199 = vmatprep.subr.bf16.mxu0 0
    %1200 = vmatpush1.bf16.msra.mxu0 %v1167
    %1201 = vmatprep.subr.bf16.mxu0 0
    %1202 = vmatpush1.bf16.msra.mxu0 %v1166
    %1203 = vmatprep.subr.bf16.mxu0 0
    %1204 = vmatpush1.bf16.msra.mxu0 %v1165
    %1205 = vmatprep.subr.bf16.mxu0 0
    %1206 = vmatpush2.bf16.msra.mxu0 0
    %1207 = vmatprep.subr.bf16.mxu0 0
    %1208 = vmatpush2.bf16.msra.mxu0 0
    %1209 = vmatprep.subr.bf16.mxu0 0
    %1210 = vmatpush2.bf16.msra.mxu0 0
    %1211 = vmatprep.subr.bf16.mxu0 0
    %1212 = vmatpush2.bf16.msra.mxu0 0
    %1213 = vmatprep.subr.bf16.mxu0 0
    %1214 = vmatpush2.bf16.msra.mxu0 0
    %1215 = vmatprep.subr.bf16.mxu0 0
    %1216 = vmatpush2.bf16.msra.mxu0 0
    %1217 = vmatprep.subr.bf16.mxu0 0
    %1218 = vmatpush2.bf16.msra.mxu0 %v1174
    %1219 = vmatprep.subr.bf16.mxu0 0
    %1220 = vmatpush2.bf16.msra.mxu0 %v1173
    %1221 = vmatprep.mubr.bf16.mxu0 %v1187
    %1222 = vmatmul.mubr.bf16.gmra.mxu0 %v1096
    %v1223 = vpop.f32.mrf.mxu0
    %v1224 = vadd.f32 %v1123, %v1223
    %v1225 = vpop.f32.mrf.mxu0
    %v1226 = vpop.f32.mrf.mxu0
    %v1227 = vpop.f32.mrf.mxu0
    %1228 = vdwg.mxu0
    %v1229 = vmax.f32 %v1224, 0.0
    %v1230 = vpack.c.bf16 %v1229, %v1229
    %v1231 = vld [vmem:[%s7] sm:$0xf]
    %v1232 = vld [vmem:[%s7 + $0x4] sm:$0xf]
    %v1233 = vld [vmem:[%s7 + $0x8] sm:$0xf]
    %v1234 = vld [vmem:[%s7 + $0xc] sm:$0xf]
    %v1235 = vld [vmem:[%s7 + $0x10] sm:$0xf]
    %v1236 = vld [vmem:[%s7 + $0x14] sm:$0xf]
    %v1237 = vld [vmem:[%s7 + $0x18] sm:$0xf]
    %v1238 = vld [vmem:[%s7 + $0x1c] sm:$0xf]
    %v1239 = vld [vmem:[%s7 + $0x20] sm:$0xf]
    %v1240 = vld [vmem:[%s7 + $0x24] sm:$0xf]
    %v1241 = vld [vmem:[%s7 + $0x28] sm:$0xf]
    %v1242 = vld [vmem:[%s7 + $0x2c] sm:$0xf]
    %v1243 = vld [vmem:[%s7 + $0x30] sm:$0x3]
    %v1244 = vld [vmem:[%s8] sm:$0x1]
    %v1246 = vlaneseq
    %v1247 = vshrl.u32 %v1246, 7
    %v1248 = vsub.s32 0, %v1247
    %v1249 = vrot.slane %v1244, %v1248
    %v1264 = vunpack.c.l.b16 %v1231
    %v1265 = vunpack.c.l.b16 %v1232
    %v1266 = vunpack.c.l.b16 %v1233
    %v1267 = vunpack.c.l.b16 %v1234
    %v1268 = vunpack.c.l.b16 %v1235
    %v1269 = vunpack.c.l.b16 %v1236
    %v1270 = vunpack.c.l.b16 %v1237
    %v1271 = vunpack.c.l.b16 %v1238
    %v1272 = vunpack.c.l.b16 %v1239
    %v1273 = vunpack.c.l.b16 %v1240
    %v1274 = vunpack.c.l.b16 %v1241
    %v1275 = vunpack.c.l.b16 %v1242
    %v1276 = vunpack.c.l.b16 %v1243
    %v1277 = vpack.c.b16 %v1265, %v1264
    %v1278 = vpack.c.b16 %v1267, %v1266
    %v1279 = vpack.c.b16 %v1269, %v1268
    %v1280 = vpack.c.b16 %v1271, %v1270
    %v1281 = vpack.c.b16 %v1273, %v1272
    %v1282 = vpack.c.b16 %v1275, %v1274
    %v1283 = vpack.c.b16 %v1276, %v1276
    %vm1290 = vcmask 818176
    %v1292 = vsel %vm1290, %v1230, 0
    %vm1294 = vcmask 1041408
    %v1296 = vsel %vm1294, %v1283, 0
    %1298 = vmatprep.subr.bf16.mxu0 0
    %1299 = vmatpush1.bf16.msra.mxu0 0
    %1300 = vmatprep.subr.bf16.mxu0 0
    %1301 = vmatpush1.bf16.msra.mxu0 %v1296
    %1302 = vmatprep.subr.bf16.mxu0 0
    %1303 = vmatpush1.bf16.msra.mxu0 %v1282
    %1304 = vmatprep.subr.bf16.mxu0 0
    %1305 = vmatpush1.bf16.msra.mxu0 %v1281
    %1306 = vmatprep.subr.bf16.mxu0 0
    %1307 = vmatpush1.bf16.msra.mxu0 %v1280
    %1308 = vmatprep.subr.bf16.mxu0 0
    %1309 = vmatpush1.bf16.msra.mxu0 %v1279
    %1310 = vmatprep.subr.bf16.mxu0 0
    %1311 = vmatpush1.bf16.msra.mxu0 %v1278
    %1312 = vmatprep.subr.bf16.mxu0 0
    %1313 = vmatpush1.bf16.msra.mxu0 %v1277
    %1314 = vmatprep.subr.bf16.mxu0 0
    %1315 = vmatpush2.bf16.msra.mxu0 0
    %1316 = vmatprep.subr.bf16.mxu0 0
    %1317 = vmatpush2.bf16.msra.mxu0 0
    %1318 = vmatprep.subr.bf16.mxu0 0
    %1319 = vmatpush2.bf16.msra.mxu0 0
    %1320 = vmatprep.subr.bf16.mxu0 0
    %1321 = vmatpush2.bf16.msra.mxu0 0
    %1322 = vmatprep.subr.bf16.mxu0 0
    %1323 = vmatpush2.bf16.msra.mxu0 0
    %1324 = vmatprep.subr.bf16.mxu0 0
    %1325 = vmatpush2.bf16.msra.mxu0 0
    %1326 = vmatprep.subr.bf16.mxu0 0
    %1327 = vmatpush2.bf16.msra.mxu0 0
    %1328 = vmatprep.subr.bf16.mxu0 0
    %1329 = vmatpush2.bf16.msra.mxu0 0
    %1330 = vmatprep.mubr.bf16.mxu0 0
    %1331 = vmatmul.mubr.bf16.gmra.mxu0 %v1292
    %v1332 = vpop.f32.mrf.mxu0
    %v1333 = vadd.f32 %v1249, %v1332
    %v1334 = vpop.f32.mrf.mxu0
    %v1335 = vpop.f32.mrf.mxu0
    %v1336 = vpop.f32.mrf.mxu0
    %1337 = vdwg.mxu0
    %1338 = vst [vmem:[#allocation4] sm:$0x3] %v1333
    // Predicated region
    $region38: #{cnn_net_forward.1} parent=1 // pred_check
      _
    $region39: #{cnn_net_forward.1} parent=1 // pred_check_branch
      %1340 = sbr.rel (0) target = $region41
    $region40: #{cnn_net_forward.1} parent=1 // pred_region
      %s1342 = ssub.s32 32, 32
      %1343 = vsyncadd [#allocation5], %s1342
      %s1345 = sshll.u32 [#allocation4], 4
      %s1346 = int_to_ptr.vmem [resolvable:$true] %s1345
      %1348 = dma.vmem_to_hbm [thread:$0]  %s1346, 32, %s9, [#allocation5]
    $region41: #{cnn_net_forward.1} parent=1 // pred_fallthru
      _
    // Predicated region
    $region42: #{cnn_net_forward.1} parent=1 // pred_check
      _
    $region43: #{cnn_net_forward.1} parent=1 // pred_check_branch
      %1350 = sbr.rel (0) target = $region45
    $region44: #{cnn_net_forward.1} parent=1 // pred_region
      %1351 = dma.done [#allocation5], 32
    $region45: #{cnn_net_forward.1} parent=1 // pred_fallthru
      _
    %1352 = vsyncpa [#allocation5], 1

</llo_original>
